<compile_context>
chip_gen: v6e
topology: v6e:2x2x1
jax: 0.10.0
libtpu: 0.0.40
codegen_flags: <defaults>
</compile_context>

<pallas_src>
import functools

import jax
import jax.numpy as jnp
from jax.experimental import pallas as pl
from jax.experimental.pallas import tpu as pltpu

_MIB = 1024 * 1024
# Per-step VMEM tile budget (double-buffered ins/outs + scratch); sized for the
# smallest generation (v7x: 64 MiB per TensorCore). v5e/v6e have headroom.
_VMEM_TILE_BUDGET = 44 * _MIB
_VMEM_LIMIT_CAP = 60 * _MIB
# Threshold for keeping the whole folded weight resident in VMEM (fast path).
_WEIGHT_RESIDENT_BYTES = 12 * _MIB


# ----------------------------- Pallas kernels ------------------------------ #
def _conv_bn_silu_fast_kernel(p_ref, w_ref, scale_ref, bias_ref, o_ref):
    # p_ref: (tm, K) bf16, w_ref: (K, Cout_pad) bf16 resident,
    # scale/bias: (1, Cout_pad) f32, o_ref: (tm, Cout_pad) bf16.
    acc = jnp.dot(p_ref[...], w_ref[...], preferred_element_type=jnp.float32)
    z = acc * scale_ref[...] + bias_ref[...]                 # f32 BN epilogue
    o_ref[...] = (z * jax.nn.sigmoid(z)).astype(o_ref.dtype)  # SiLU, bf16 store


def _conv_bn_silu_tiled_kernel(p_ref, w_ref, scale_ref, bias_ref, o_ref,
                               acc_ref):
    # 3-D grid (i, j, k); k is the reduction axis (last); acc_ref is f32 VMEM.
    @pl.when(pl.program_id(2) == 0)
    def _():
        acc_ref[...] = jnp.zeros_like(acc_ref)

    acc_ref[...] += jnp.dot(p_ref[...], w_ref[...],
                            preferred_element_type=jnp.float32)

    @pl.when(pl.program_id(2) == pl.num_programs(2) - 1)
    def _():
        z = acc_ref[...] * scale_ref[...] + bias_ref[...]
        o_ref[...] = (z * jax.nn.sigmoid(z)).astype(o_ref.dtype)


# ----------------------------- Tile selection ------------------------------ #
def _largest_divisor_tile(dim, unit, target):
    """Largest multiple of `unit` that divides `dim` and is <= target; None if
    no such divisor exists."""
    if dim % unit != 0:
        return None
    cand = (min(target, dim) // unit) * unit
    while cand >= unit:
        if dim % cand == 0:
            return cand
        cand -= unit
    return None


def _pick_m_tile(m, target):
    """Divisor-of-M tile (multiple of 8); prefers >=2 grid steps so the
    'parallel' M axis can feed both v7x TensorCores. None -> caller pads."""
    if m >= 512:
        t = _largest_divisor_tile(m, 8, min(target, m // 2))
        if t is not None:
            return t
    return _largest_divisor_tile(m, 8, target)


# ----------------------------- GEMM wrapper -------------------------------- #
def conv_bn_silu_matmul(patches, w2d, scale, bias):
    """SiLU((patches @ w2d) * scale + bias).

    patches: (M, K) bf16 im2col rows; w2d: (K, Cout_pad) bf16 (unscaled);
    scale/bias: (1, Cout_pad) f32 folded eval-BN. Returns (M, Cout_pad) bf16.
    """
    M, K = patches.shape
    Cout_pad = w2d.shape[1]
    out_dtype = jnp.bfloat16

    weight_bytes = K * Cout_pad * 2
    flops = 2 * M * K * Cout_pad
    transcendentals = M * Cout_pad

    if weight_bytes <= _WEIGHT_RESIDENT_BYTES:
        # ---------- fast path: weight resident, 1-D grid over M ---------- #
        row_bytes = 4 * K + 4 * Cout_pad        # dbl-buffered patches + output, per M row
        avail = _VMEM_TILE_BUDGET - 2 * weight_bytes - 4 * Cout_pad * 4
        tm_target = int(min(1024, max(8, (avail // row_bytes) // 8 * 8)))
        tm = _pick_m_tile(M, tm_target)
        M_pad = M
        if tm is None:
            # TODO(synk): ragged last M block; padding copies the patches array
            # (rare: M = N*Ho*Wo is almost always a multiple of 8).
            tm = min(tm_target, 512)
            M_pad = pl.cdiv(M, tm) * tm
            patches = jnp.pad(patches, ((0, M_pad - M), (0, 0)))

        est_vmem = (2 * tm * K * 2 + 2 * weight_bytes
                    + 2 * tm * Cout_pad * 2 + 4 * Cout_pad * 4)
        out = pl.pallas_call(
            _conv_bn_silu_fast_kernel,
            out_shape=jax.ShapeDtypeStruct((M_pad, Cout_pad), out_dtype),
            grid_spec=pltpu.PrefetchScalarGridSpec(
                num_scalar_prefetch=0,
                grid=(M_pad // tm,),
                in_specs=[
                    pl.BlockSpec((tm, K), lambda i: (i, 0)),
                    pl.BlockSpec((K, Cout_pad), lambda i: (0, 0)),   # resident
                    pl.BlockSpec((1, Cout_pad), lambda i: (0, 0)),
                    pl.BlockSpec((1, Cout_pad), lambda i: (0, 0)),
                ],
                out_specs=pl.BlockSpec((tm, Cout_pad), lambda i: (i, 0)),
            ),
            compiler_params=pltpu.CompilerParams(
                dimension_semantics=("parallel",),
                vmem_limit_bytes=int(min(_VMEM_LIMIT_CAP,
                                         max(32 * _MIB, 2 * est_vmem)))),
            cost_estimate=pl.CostEstimate(
                flops=flops, transcendentals=transcendentals,
                bytes_accessed=M_pad * K * 2 + weight_bytes
                + M_pad * Cout_pad * 2),
        )(patches, w2d, scale, bias)
        return out[:M]

    # ------------- tiled path: weight exceeds VMEM residency -------------- #
    # Grow tn first (cuts re-reads of the dominant im2col operand); 256-align
    # tn/tk for the 256-wide v6e/v7x MXU.
    tn = _largest_divisor_tile(Cout_pad, 256, 512) or Cout_pad
    tk = (_largest_divisor_tile(K, 256, 1024)
          or _largest_divisor_tile(K, 128, 1024)
          or K)
    tm = _pick_m_tile(M, 512)
    M_pad = M
    if tm is None:
        tm = 512
        M_pad = pl.cdiv(M, tm) * tm
        patches = jnp.pad(patches, ((0, M_pad - M), (0, 0)))

    est_vmem = (2 * tm * tk * 2 + 2 * tk * tn * 2 + 2 * tm * tn * 2
                + tm * tn * 4 + 4 * tn * 4)
    out = pl.pallas_call(
        _conv_bn_silu_tiled_kernel,
        out_shape=jax.ShapeDtypeStruct((M_pad, Cout_pad), out_dtype),
        grid_spec=pltpu.PrefetchScalarGridSpec(
            num_scalar_prefetch=0,
            grid=(M_pad // tm, Cout_pad // tn, K // tk),
            in_specs=[
                pl.BlockSpec((tm, tk), lambda i, j, k: (i, k)),
                pl.BlockSpec((tk, tn), lambda i, j, k: (k, j)),
                pl.BlockSpec((1, tn), lambda i, j, k: (0, j)),
                pl.BlockSpec((1, tn), lambda i, j, k: (0, j)),
            ],
            out_specs=pl.BlockSpec((tm, tn), lambda i, j, k: (i, j)),
            scratch_shapes=[pltpu.VMEM((tm, tn), jnp.float32)],
        ),
        compiler_params=pltpu.CompilerParams(
            dimension_semantics=("parallel", "parallel", "arbitrary"),
            vmem_limit_bytes=int(min(_VMEM_LIMIT_CAP,
                                     max(32 * _MIB, 2 * est_vmem)))),
        cost_estimate=pl.CostEstimate(
            flops=flops, transcendentals=transcendentals,
            bytes_accessed=(M_pad * K * 2 * (Cout_pad // tn)
                            + K * Cout_pad * 2 * (M_pad // tm)
                            + M_pad * Cout_pad * 2)),
    )(patches, w2d, scale, bias)
    return out[:M]


# ------------------------------- Glue (JAX) -------------------------------- #
def autopad(kernel_size):
    return kernel_size // 2


def im2col_nhwc(x_nhwc, kh, kw, stride, pad):
    """Extract conv patches. Returns (N*Ho*Wo, kh*kw*C), Ho, Wo.
    Flat K ordering is (kh, kw, cin)."""
    N, H, W, C = x_nhwc.shape
    xp = jnp.pad(x_nhwc, ((0, 0), (pad, pad), (pad, pad), (0, 0)))
    Ho = (H + 2 * pad - kh) // stride + 1
    Wo = (W + 2 * pad - kw) // stride + 1
    cols = []
    for i in range(kh):
        for j in range(kw):
            cols.append(
                xp[:, i:i + stride * Ho:stride, j:j + stride * Wo:stride, :])
    patches = jnp.stack(cols, axis=3)            # (N, Ho, Wo, kh*kw, C)
    return patches.reshape(N * Ho * Wo, kh * kw * C), Ho, Wo


@functools.partial(jax.jit, static_argnames=("kernel_size", "stride"))
def conv_module_forward(x_nchw, weight, gamma, beta, run_mean, run_var,
                        *, kernel_size, stride, eps=1e-5):
    """Full Conv module forward: SiLU(BN(Conv2d(x))), eval-mode BN."""
    N, Cin, H, W = x_nchw.shape
    Cout = weight.shape[0]
    pad = autopad(kernel_size)

    # NCHW -> NHWC, bf16 before im2col so the big patches array is half-width.
    x_nhwc = jnp.transpose(x_nchw, (0, 2, 3, 1)).astype(jnp.bfloat16)
    patches, Ho, Wo = im2col_nhwc(x_nhwc, kernel_size, kernel_size, stride, pad)

    # Eval-mode BatchNorm as an f32 epilogue: y = conv * scale + shift.
    scale = gamma / jnp.sqrt(run_var + eps)                       # (Cout,)
    shift = beta - run_mean * scale                               # (Cout,)

    # (Cout, Cin, KH, KW) -> (KH, KW, Cin, Cout) -> (K, Cout); matches patches.
    K = kernel_size * kernel_size * Cin
    w2d = jnp.transpose(weight, (2, 3, 1, 0)).reshape(K, Cout)

    # Pad Cout to a multiple of 256: lane-dense stores + full v6e/v7x MXU width.
    Cout_pad = pl.cdiv(Cout, 256) * 256
    if Cout_pad != Cout:
        w2d = jnp.pad(w2d, ((0, 0), (0, Cout_pad - Cout)))
        scale = jnp.pad(scale, (0, Cout_pad - Cout))
        shift = jnp.pad(shift, (0, Cout_pad - Cout))

    out2d = conv_bn_silu_matmul(
        patches,
        w2d.astype(jnp.bfloat16),
        scale.reshape(1, Cout_pad).astype(jnp.float32),
        shift.reshape(1, Cout_pad).astype(jnp.float32))           # (M, Cout_pad) bf16

    out = out2d[:, :Cout].reshape(N, Ho, Wo, Cout)
    # NHWC -> NCHW; cast back to the module dtype fused into the transpose.
    return jnp.transpose(out, (0, 3, 1, 2)).astype(x_nchw.dtype)


# ------------------------------ Reference ---------------------------------- #
def reference_forward(x_nchw, weight, gamma, beta, run_mean, run_var,
                      *, kernel_size, stride, eps=1e-5):
    pad = autopad(kernel_size)
    z = jax.lax.conv_general_dilated(
        x_nchw, weight, window_strides=(stride, stride),
        padding=[(pad, pad), (pad, pad)],
        dimension_numbers=("NCHW", "OIHW", "NCHW"),
        precision=jax.lax.Precision.HIGHEST)
    scale = (gamma / jnp.sqrt(run_var + eps)).reshape(1, -1, 1, 1)
    shift = (beta - run_mean * (gamma / jnp.sqrt(run_var + eps))).reshape(1, -1, 1, 1)
    z = z * scale + shift
    return z * jax.nn.sigmoid(z)


# --------------------------------- Main ------------------------------------ #
if __name__ == "__main__":
    # Small shapes consistent with the module: Conv(in=4, out=8, k=3, s=1)
    N, Cin, H, W = 2, 4, 16, 16
    Cout, K_SZ, STRIDE = 8, 3, 1

    key = jax.random.PRNGKey(0)
    k_x, k_w, k_g, k_b, k_m, k_v = jax.random.split(key, 6)

    x = jax.random.normal(k_x, (N, Cin, H, W), dtype=jnp.float32)
    weight = 0.1 * jax.random.normal(k_w, (Cout, Cin, K_SZ, K_SZ), dtype=jnp.float32)
    gamma = 1.0 + 0.1 * jax.random.normal(k_g, (Cout,), dtype=jnp.float32)
    beta = 0.1 * jax.random.normal(k_b, (Cout,), dtype=jnp.float32)
    run_mean = 0.1 * jax.random.normal(k_m, (Cout,), dtype=jnp.float32)
    run_var = jnp.abs(jax.random.normal(k_v, (Cout,), dtype=jnp.float32)) + 0.5

    out = conv_module_forward(x, weight, gamma, beta, run_mean, run_var,
                              kernel_size=K_SZ, stride=STRIDE)
    out = jax.block_until_ready(out)

    ref = reference_forward(x, weight, gamma, beta, run_mean, run_var,
                            kernel_size=K_SZ, stride=STRIDE)
    ref = jax.block_until_ready(ref)

    assert out.shape == (N, Cout, H, W), out.shape
    # bf16 MXU inputs / bf16 kernel output vs f32 reference -> bf16 tolerance.
    assert jnp.allclose(out, ref, atol=5e-2, rtol=5e-2), "mismatch vs reference"

    print("KERNEL_OK")
</pallas_src>

<mosaic_0001>
module attributes {stable_mosaic.version = 11 : i64} {
  func.func @_conv_bn_silu_fast_kernel(%arg0: i32, %arg1: memref<256x36xbf16, #tpu.memory_space<vmem>>, %arg2: memref<36x256xbf16, #tpu.memory_space<vmem>>, %arg3: memref<1x256xf32, #tpu.memory_space<vmem>>, %arg4: memref<1x256xf32, #tpu.memory_space<vmem>>, %arg5: memref<256x256xbf16, #tpu.memory_space<vmem>>) attributes {dimension_semantics = [#tpu.dimension_semantics<parallel>], iteration_bounds = array<i64: 2>, scalar_prefetch = 0 : i64, scratch_operands = 0 : i64, tpu.core_type = #tpu.core_type<tc>, window_params = [{transform_indices = @transform_0, window_bounds = array<i64: 256, 36>}, {pipeline_mode = #tpu.pipeline_mode<synchronous>, transform_indices = @transform_1, window_bounds = array<i64: 36, 256>}, {pipeline_mode = #tpu.pipeline_mode<synchronous>, transform_indices = @transform_2, window_bounds = array<i64: 1, 256>}, {pipeline_mode = #tpu.pipeline_mode<synchronous>, transform_indices = @transform_3, window_bounds = array<i64: 1, 256>}, {transform_indices = @transform_4, window_bounds = array<i64: 256, 256>}]} {
    %c0 = arith.constant 0 : index
    %c0_0 = arith.constant 0 : index
    %0 = vector.load %arg1[%c0, %c0_0] : memref<256x36xbf16, #tpu.memory_space<vmem>>, vector<256x36xbf16>
    %c0_1 = arith.constant 0 : index
    %c0_2 = arith.constant 0 : index
    %1 = vector.load %arg2[%c0_1, %c0_2] : memref<36x256xbf16, #tpu.memory_space<vmem>>, vector<36x256xbf16>
    %cst = arith.constant dense<0.000000e+00> : vector<256x256xf32>
    %2 = tpu.matmul %0, %1, %cst {dimension_numbers = #tpu.dot_dimension_numbers<[1], [0], [0], [1], [0, 0, 1, 1], [], []>} : vector<256x36xbf16>, vector<36x256xbf16>, vector<256x256xf32> -> vector<256x256xf32>
    %c0_3 = arith.constant 0 : index
    %c0_4 = arith.constant 0 : index
    %3 = vector.load %arg3[%c0_3, %c0_4] : memref<1x256xf32, #tpu.memory_space<vmem>>, vector<1x256xf32>
    %4 = vector.broadcast %3 : vector<1x256xf32> to vector<256x256xf32>
    %5 = arith.mulf %2, %4 : vector<256x256xf32>
    %c0_5 = arith.constant 0 : index
    %c0_6 = arith.constant 0 : index
    %6 = vector.load %arg4[%c0_5, %c0_6] : memref<1x256xf32, #tpu.memory_space<vmem>>, vector<1x256xf32>
    %7 = vector.broadcast %6 : vector<1x256xf32> to vector<256x256xf32>
    %8 = arith.addf %5, %7 : vector<256x256xf32>
    %9 = arith.negf %8 : vector<256x256xf32>
    %10 = math.exp %9 : vector<256x256xf32>
    %cst_7 = arith.constant 1.000000e+00 : f32
    %11 = vector.broadcast %cst_7 : f32 to vector<256x256xf32>
    %12 = arith.addf %11, %10 : vector<256x256xf32>
    %13 = arith.divf %11, %12 : vector<256x256xf32>
    %14 = arith.mulf %8, %13 : vector<256x256xf32>
    %15 = arith.truncf %14 : vector<256x256xf32> to vector<256x256xbf16>
    %c0_8 = arith.constant 0 : index
    %c0_9 = arith.constant 0 : index
    %16 = vector.load %arg5[%c0_8, %c0_9] : memref<256x256xbf16, #tpu.memory_space<vmem>>, vector<256x256xbf16>
    tpu.vector_store %arg5[%c0_8, %c0_9], %15 {strides = array<i32>} : memref<256x256xbf16, #tpu.memory_space<vmem>>, vector<256x256xbf16>,
    return
  }
  func.func @transform_0(%arg0: i32) -> (i32, i32) {
    %c0_i32 = arith.constant 0 : i32
    %c0_i32_0 = arith.constant 0 : i32
    return %arg0, %c0_i32 : i32, i32
  }
  func.func @transform_1(%arg0: i32) -> (i32, i32) {
    %c0_i32 = arith.constant 0 : i32
    %c0_i32_0 = arith.constant 0 : i32
    %c0_i32_1 = arith.constant 0 : i32
    return %c0_i32, %c0_i32_0 : i32, i32
  }
  func.func @transform_2(%arg0: i32) -> (i32, i32) {
    %c0_i32 = arith.constant 0 : i32
    %c0_i32_0 = arith.constant 0 : i32
    %c0_i32_1 = arith.constant 0 : i32
    return %c0_i32, %c0_i32_0 : i32, i32
  }
  func.func @transform_3(%arg0: i32) -> (i32, i32) {
    %c0_i32 = arith.constant 0 : i32
    %c0_i32_0 = arith.constant 0 : i32
    %c0_i32_1 = arith.constant 0 : i32
    return %c0_i32, %c0_i32_0 : i32, i32
  }
  func.func @transform_4(%arg0: i32) -> (i32, i32) {
    %c0_i32 = arith.constant 0 : i32
    %c0_i32_0 = arith.constant 0 : i32
    return %arg0, %c0_i32 : i32, i32
  }
}

</mosaic_0001>

<llo_original>
// kernel: conv_module_forward.1
$region0: #{conv_module_forward.1}
  #allocation0 [shape = 'u32[]', space=smem, size = 0x4, offset = 0x4, fixed_abs, tag = 'smem constant byte address 0x4 - core index']
  #allocation1 [shape = 'u32[144,128]{1,0:T(1,128)}', space=vmem, size = 0x12000, scoped, tag = 'internal scratch']
  %s0 = inlined_call_operand.vmem [shape: bf16[512,36], index: 0, kind: input, shape index: {}]
  %s1 = inlined_call_operand.vmem [shape: bf16[36,256], index: 1, kind: input, shape index: {}]
  %s2 = inlined_call_operand.vmem [shape: f32[1,256], index: 2, kind: input, shape index: {}]
  %s3 = inlined_call_operand.vmem [shape: f32[1,256], index: 3, kind: input, shape index: {}]
  %s4 = inlined_call_operand.vmem [shape: bf16[512,256], index: 4, kind: output, shape index: {}]
  %s5 = sld [smem:[#allocation0]]
  $region49: #{conv_module_forward.1} parent=0
    _
  %s7 = ssub.s32 1, %s5
  %s8 = scalar_select 0, %s7, %s5
  loop: start=0, step=1, limit=4
  $region2: #{conv_module_forward.1} parent=0 // loop_pre_header
    _
  $region3: #{conv_module_forward.1} parent=0 // loop_header
    %s10 = sphi 0, %s14
    %p11 = scmp.ge.s32.totalorder %s10, 4
    %s20 = sphi 0, %s22
    %s23 = sphi 0, %s20
    %s24 = sphi 0, %s23
    %s40 = sphi 0, %s24
    %s44 = sphi 0, %s44
    %s46 = sphi 0, %s44
    %s47 = sphi 0, %s46
    %s61 = sphi 0, %s47
    %s65 = sphi 0, %s65
    %s67 = sphi 0, %s65
    %s68 = sphi 0, %s67
    %s82 = sphi 0, %s68
    %s86 = sphi 0, %s86
    %s88 = sphi 0, %s86
    %s89 = sphi 0, %s88
    %s103 = sphi 0, %s89
    %s109 = sphi 0, %s111
    %s112 = sphi 0, %s109
    %s113 = sphi 0, %s112
    %s129 = sphi 0, %s113
  $region4: #{conv_module_forward.1} parent=0 // loop_header_branch
    %13 = sbr.rel (%p11) target = $region8
  $region5: #{conv_module_forward.1} parent=0 // loop_body
    %s15 = ssub.s32 %s10, 1
    %s16 = ssub.s32 %s10, 2
    %s17 = sadd.s32 %s10, 1
    %s18 = ssub.s32 %s10, %s17
    %p19 = scmp.eq.s32.totalorder %s18, 0
    %s21 = sadd.s32 %s20, 1
    %s22 = scalar_select %p19, %s20, %s21
    %p25 = pneg %p19
    %p26 = scmp.eq.s32.totalorder %s10, 1
    %p27 = por %p25, %p26
    %p28 = scmp.ne.s32.totalorder %s20, %s23
    %p29 = scmp.eq.s32.totalorder %s10, 0
    %p30 = por %p28, %p29
    %p31 = scmp.ne.s32.totalorder %s20, %s23
    %p32 = scmp.eq.s32.totalorder %s15, 1
    %p33 = por %p31, %p32
    %p34 = scmp.ne.s32.totalorder %s23, %s24
    %p35 = scmp.eq.s32.totalorder %s15, 0
    %p36 = por %p34, %p35
    %p37 = scmp.ne.s32.totalorder %s23, %s24
    %p38 = scmp.eq.s32.totalorder %s16, 1
    %p39 = por %p37, %p38
    %p41 = scmp.ne.s32.totalorder %s24, %s40
    %p42 = scmp.eq.s32.totalorder %s16, 0
    %p43 = por %p41, %p42
    %s45 = sadd.s32 %s44, 1
    %p48 = scmp.eq.s32.totalorder %s10, 1
    %p49 = scmp.ne.s32.totalorder %s44, %s46
    %p50 = scmp.eq.s32.totalorder %s10, 0
    %p51 = por %p49, %p50
    %p52 = scmp.ne.s32.totalorder %s44, %s46
    %p53 = scmp.eq.s32.totalorder %s15, 1
    %p54 = por %p52, %p53
    %p55 = scmp.ne.s32.totalorder %s46, %s47
    %p56 = scmp.eq.s32.totalorder %s15, 0
    %p57 = por %p55, %p56
    %p58 = scmp.ne.s32.totalorder %s46, %s47
    %p59 = scmp.eq.s32.totalorder %s16, 1
    %p60 = por %p58, %p59
    %p62 = scmp.ne.s32.totalorder %s47, %s61
    %p63 = scmp.eq.s32.totalorder %s16, 0
    %p64 = por %p62, %p63
    %s66 = sadd.s32 %s65, 1
    %p69 = scmp.eq.s32.totalorder %s10, 1
    %p70 = scmp.ne.s32.totalorder %s65, %s67
    %p71 = scmp.eq.s32.totalorder %s10, 0
    %p72 = por %p70, %p71
    %p73 = scmp.ne.s32.totalorder %s65, %s67
    %p74 = scmp.eq.s32.totalorder %s15, 1
    %p75 = por %p73, %p74
    %p76 = scmp.ne.s32.totalorder %s67, %s68
    %p77 = scmp.eq.s32.totalorder %s15, 0
    %p78 = por %p76, %p77
    %p79 = scmp.ne.s32.totalorder %s67, %s68
    %p80 = scmp.eq.s32.totalorder %s16, 1
    %p81 = por %p79, %p80
    %p83 = scmp.ne.s32.totalorder %s68, %s82
    %p84 = scmp.eq.s32.totalorder %s16, 0
    %p85 = por %p83, %p84
    %s87 = sadd.s32 %s86, 1
    %p90 = scmp.eq.s32.totalorder %s10, 1
    %p91 = scmp.ne.s32.totalorder %s86, %s88
    %p92 = scmp.eq.s32.totalorder %s10, 0
    %p93 = por %p91, %p92
    %p94 = scmp.ne.s32.totalorder %s86, %s88
    %p95 = scmp.eq.s32.totalorder %s15, 1
    %p96 = por %p94, %p95
    %p97 = scmp.ne.s32.totalorder %s88, %s89
    %p98 = scmp.eq.s32.totalorder %s15, 0
    %p99 = por %p97, %p98
    %p100 = scmp.ne.s32.totalorder %s88, %s89
    %p101 = scmp.eq.s32.totalorder %s16, 1
    %p102 = por %p100, %p101
    %p104 = scmp.ne.s32.totalorder %s89, %s103
    %p105 = scmp.eq.s32.totalorder %s16, 0
    %p106 = por %p104, %p105
    %s107 = ssub.s32 %s10, %s17
    %p108 = scmp.eq.s32.totalorder %s107, 0
    %s110 = sadd.s32 %s109, 1
    %s111 = scalar_select %p108, %s109, %s110
    %p114 = pneg %p108
    %p115 = scmp.eq.s32.totalorder %s10, 1
    %p116 = por %p114, %p115
    %p117 = scmp.ne.s32.totalorder %s109, %s112
    %p118 = scmp.eq.s32.totalorder %s10, 0
    %p119 = por %p117, %p118
    %p120 = scmp.ne.s32.totalorder %s109, %s112
    %p121 = scmp.eq.s32.totalorder %s15, 1
    %p122 = por %p120, %p121
    %p123 = scmp.ne.s32.totalorder %s112, %s113
    %p124 = scmp.eq.s32.totalorder %s15, 0
    %p125 = por %p123, %p124
    %p126 = scmp.ne.s32.totalorder %s112, %s113
    %p127 = scmp.eq.s32.totalorder %s16, 1
    %p128 = por %p126, %p127
    %p130 = scmp.ne.s32.totalorder %s113, %s129
    %p131 = scmp.eq.s32.totalorder %s16, 0
    %p132 = por %p130, %p131
    %p133 = scmp.le.s32.totalorder 1, %s10
    %p134 = scmp.lt.s32.totalorder %s10, 3
    %p135 = pnand %p133, %p134
    %p136 = pneg %p135
    // Predicated region
    $region9: #{conv_module_forward.1} parent=5 // pred_check
      _
    $region10: #{conv_module_forward.1} parent=5 // pred_check_branch
      %138 = sbr.rel (%p135) target = $region12
    $region11: #{conv_module_forward.1} parent=5 // pred_region
      %s139 = ssub.s32 %s10, 1
      // Predicated region
      $region13: #{conv_module_forward.1} parent=11 // pred_check
        %p140 = pneg %p57
      $region14: #{conv_module_forward.1} parent=11 // pred_check_branch
        %142 = sbr.rel (%p140) target = $region16
      $region15: #{conv_module_forward.1} parent=11 // pred_region
        _
      $region16: #{conv_module_forward.1} parent=11 // pred_fallthru
        _
      // Predicated region
      $region17: #{conv_module_forward.1} parent=11 // pred_check
        %p143 = pneg %p78
      $region18: #{conv_module_forward.1} parent=11 // pred_check_branch
        %145 = sbr.rel (%p143) target = $region20
      $region19: #{conv_module_forward.1} parent=11 // pred_region
        _
      $region20: #{conv_module_forward.1} parent=11 // pred_fallthru
        _
      // Predicated region
      $region21: #{conv_module_forward.1} parent=11 // pred_check
        %p146 = pneg %p99
      $region22: #{conv_module_forward.1} parent=11 // pred_check_branch
        %148 = sbr.rel (%p146) target = $region24
      $region23: #{conv_module_forward.1} parent=11 // pred_region
        _
      $region24: #{conv_module_forward.1} parent=11 // pred_fallthru
        _
    $region12: #{conv_module_forward.1} parent=5 // pred_fallthru
      _
    %p149 = scmp.lt.s32.totalorder %s10, 2
    // Predicated region
    $region25: #{conv_module_forward.1} parent=5 // pred_check
      %p150 = pneg %p149
    $region26: #{conv_module_forward.1} parent=5 // pred_check_branch
      %152 = sbr.rel (%p150) target = $region28
    $region27: #{conv_module_forward.1} parent=5 // pred_region
      // Predicated region
      $region29: #{conv_module_forward.1} parent=27 // pred_check
        %p153 = pneg %p30
      $region30: #{conv_module_forward.1} parent=27 // pred_check_branch
        %155 = sbr.rel (%p153) target = $region32
      $region31: #{conv_module_forward.1} parent=27 // pred_region
        %s156 = smul.u32 32, %s10
        %p157 = scmp.lt.s32.totalorder %s156, 63
        %s158 = scalar_select %p157, %s156, 63
        %s159 = smul.addr %s158, 4
        %s160 = scalar_lea.vmem %s0, %s159
        %s161 = smul.u32 32, %s10
      $region32: #{conv_module_forward.1} parent=27 // pred_fallthru
        _
    $region28: #{conv_module_forward.1} parent=5 // pred_fallthru
      _
    %p162 = scmp.le.s32.totalorder 1, %s10
    %p163 = scmp.lt.s32.totalorder %s10, 3
    %p164 = pnand %p162, %p163
    %p165 = pneg %p164
    // Predicated region
    $region33: #{conv_module_forward.1} parent=5 // pred_check
      _
    $region34: #{conv_module_forward.1} parent=5 // pred_check_branch
      %167 = sbr.rel (%p164) target = $region36
    $region35: #{conv_module_forward.1} parent=5 // pred_region
      %s168 = ssub.s32 %s10, 1
      %s169 = smul.u32 32, %s15
      %p170 = scmp.lt.s32.totalorder %s169, 63
      %s171 = scalar_select %p170, %s169, 63
      %s172 = smul.addr %s171, 4
      %s173 = scalar_lea.vmem %s0, %s172
      %p174 = pneg %p36
      %p175 = pneg %p33
      %p176 = pneg %p57
      %p177 = pneg %p54
      %p178 = pneg %p78
      %p179 = pneg %p75
      %p180 = pneg %p99
      %p181 = pneg %p96
      %p182 = pneg %p125
      %p183 = pneg %p122
      %s184 = smul.u32 32, %s15
      %p185 = scmp.lt.s32.totalorder %s184, 63
      %s186 = scalar_select %p185, %s184, 63
      %s187 = smul.addr %s186, 2
      %s188 = smul.addr %s187, 4
      %s189 = scalar_lea.vmem %s4, %s188
      %s190 = smul.u32 32, %s15
      %p191 = scmp.lt.s32.totalorder %s190, 63
      %s192 = scalar_select %p191, %s190, 63
      %s193 = smul.addr %s192, 4
      %s194 = scalar_lea.vmem %s0, %s193
      %s195 = smul.u32 32, %s15
      %s196 = smul.u32 32, %s15
      %p197 = scmp.lt.s32.totalorder %s196, 63
      %s198 = scalar_select %p197, %s196, 63
      %s199 = smul.addr %s198, 2
      %s200 = smul.addr %s199, 4
      %s201 = scalar_lea.vmem %s4, %s200
      %s202 = smul.u32 32, %s15
      %v204 = vld [vmem:[%s194] sm:$0xf]
      %v205 = vld [vmem:[%s194 + $0x4] sm:$0xf]
      %v206 = vld [vmem:[%s194 + $0x8] sm:$0xf]
      %v207 = vld [vmem:[%s194 + $0xc] sm:$0xf]
      %v208 = vld [vmem:[%s194 + $0x10] sm:$0xf]
      %v209 = vld [vmem:[%s194 + $0x14] sm:$0xf]
      %v210 = vld [vmem:[%s194 + $0x18] sm:$0xf]
      %v211 = vld [vmem:[%s194 + $0x1c] sm:$0xf]
      %v212 = vld [vmem:[%s194 + $0x20] sm:$0xf]
      %v213 = vld [vmem:[%s194 + $0x24] sm:$0xf]
      %v214 = vld [vmem:[%s194 + $0x28] sm:$0xf]
      %v215 = vld [vmem:[%s194 + $0x2c] sm:$0xf]
      %v216 = vld [vmem:[%s194 + $0x30] sm:$0xf]
      %v217 = vld [vmem:[%s194 + $0x34] sm:$0xf]
      %v218 = vld [vmem:[%s194 + $0x38] sm:$0xf]
      %v219 = vld [vmem:[%s194 + $0x3c] sm:$0xf]
      %v220 = vld [vmem:[%s194 + $0x40] sm:$0xf]
      %v221 = vld [vmem:[%s194 + $0x44] sm:$0xf]
      %v222 = vld [vmem:[%s194 + $0x48] sm:$0xf]
      %v223 = vld [vmem:[%s194 + $0x4c] sm:$0xf]
      %v224 = vld [vmem:[%s194 + $0x50] sm:$0xf]
      %v225 = vld [vmem:[%s194 + $0x54] sm:$0xf]
      %v226 = vld [vmem:[%s194 + $0x58] sm:$0xf]
      %v227 = vld [vmem:[%s194 + $0x5c] sm:$0xf]
      %v228 = vld [vmem:[%s194 + $0x60] sm:$0xf]
      %v229 = vld [vmem:[%s194 + $0x64] sm:$0xf]
      %v230 = vld [vmem:[%s194 + $0x68] sm:$0xf]
      %v231 = vld [vmem:[%s194 + $0x6c] sm:$0xf]
      %v232 = vld [vmem:[%s194 + $0x70] sm:$0xf]
      %v233 = vld [vmem:[%s194 + $0x74] sm:$0xf]
      %v234 = vld [vmem:[%s194 + $0x78] sm:$0xf]
      %v235 = vld [vmem:[%s194 + $0x7c] sm:$0xf]
      %v236 = vld [vmem:[%s1] sm:$0xff]
      %v237 = vld [vmem:[%s1 + $0x8] sm:$0xff]
      %v238 = vld [vmem:[%s1 + $0x10] sm:$0xff]
      %v239 = vld [vmem:[%s1 + $0x18] sm:$0xff]
      %v240 = vld [vmem:[%s1 + $0x20] sm:$0x33]
      %v273 = vunpack.c.l.b16 %v204
      %v274 = vunpack.c.l.b16 %v205
      %v275 = vunpack.c.l.b16 %v206
      %v276 = vunpack.c.l.b16 %v207
      %v277 = vunpack.c.l.b16 %v208
      %v278 = vunpack.c.l.b16 %v209
      %v279 = vunpack.c.l.b16 %v210
      %v280 = vunpack.c.l.b16 %v211
      %v281 = vunpack.c.l.b16 %v212
      %v282 = vunpack.c.l.b16 %v213
      %v283 = vunpack.c.l.b16 %v214
      %v284 = vunpack.c.l.b16 %v215
      %v285 = vunpack.c.l.b16 %v216
      %v286 = vunpack.c.l.b16 %v217
      %v287 = vunpack.c.l.b16 %v218
      %v288 = vunpack.c.l.b16 %v219
      %v289 = vunpack.c.l.b16 %v220
      %v290 = vunpack.c.l.b16 %v221
      %v291 = vunpack.c.l.b16 %v222
      %v292 = vunpack.c.l.b16 %v223
      %v293 = vunpack.c.l.b16 %v224
      %v294 = vunpack.c.l.b16 %v225
      %v295 = vunpack.c.l.b16 %v226
      %v296 = vunpack.c.l.b16 %v227
      %v297 = vunpack.c.l.b16 %v228
      %v298 = vunpack.c.l.b16 %v229
      %v299 = vunpack.c.l.b16 %v230
      %v300 = vunpack.c.l.b16 %v231
      %v301 = vunpack.c.l.b16 %v232
      %v302 = vunpack.c.l.b16 %v233
      %v303 = vunpack.c.l.b16 %v234
      %v304 = vunpack.c.l.b16 %v235
      %v305 = vpack.c.b16 %v274, %v273
      %v306 = vpack.c.b16 %v276, %v275
      %v307 = vpack.c.b16 %v278, %v277
      %v308 = vpack.c.b16 %v280, %v279
      %v309 = vpack.c.b16 %v282, %v281
      %v310 = vpack.c.b16 %v284, %v283
      %v311 = vpack.c.b16 %v286, %v285
      %v312 = vpack.c.b16 %v288, %v287
      %v313 = vpack.c.b16 %v290, %v289
      %v314 = vpack.c.b16 %v292, %v291
      %v315 = vpack.c.b16 %v294, %v293
      %v316 = vpack.c.b16 %v296, %v295
      %v317 = vpack.c.b16 %v298, %v297
      %v318 = vpack.c.b16 %v300, %v299
      %v319 = vpack.c.b16 %v302, %v301
      %v320 = vpack.c.b16 %v304, %v303
      %v326 = vunpack.c.l.b16 %v236
      %v327 = vunpack.c.h.b16 %v236
      %v328 = vunpack.c.l.b16 %v237
      %v329 = vunpack.c.h.b16 %v237
      %v330 = vunpack.c.l.b16 %v238
      %v331 = vunpack.c.h.b16 %v238
      %v332 = vunpack.c.l.b16 %v239
      %v333 = vunpack.c.h.b16 %v239
      %v334 = vunpack.c.l.b16 %v240
      %v335 = vunpack.c.h.b16 %v240
      %v336 = vpack.c.b16 %v328, %v326
      %v337 = vpack.c.b16 %v329, %v327
      %v338 = vpack.c.b16 %v332, %v330
      %v339 = vpack.c.b16 %v333, %v331
      %v340 = vpack.c.b16 %v334, %v334
      %v341 = vpack.c.b16 %v335, %v335
      %vm346 = vcmask 293888
      %v348 = vsel %vm346, %v305, 0
      %v351 = vsel %vm346, %v306, 0
      %v354 = vsel %vm346, %v307, 0
      %v357 = vsel %vm346, %v308, 0
      %v360 = vsel %vm346, %v309, 0
      %v363 = vsel %vm346, %v310, 0
      %v366 = vsel %vm346, %v311, 0
      %v369 = vsel %vm346, %v312, 0
      %v372 = vsel %vm346, %v313, 0
      %v375 = vsel %vm346, %v314, 0
      %v378 = vsel %vm346, %v315, 0
      %v381 = vsel %vm346, %v316, 0
      %v384 = vsel %vm346, %v317, 0
      %v387 = vsel %vm346, %v318, 0
      %v390 = vsel %vm346, %v319, 0
      %v393 = vsel %vm346, %v320, 0
      %vm395 = vcmask 1041408
      %v397 = vsel %vm395, %v340, 0
      %v400 = vsel %vm395, %v341, 0
      %402 = vmatprep.subr.bf16.mxu0 0
      %403 = vmatpush1.bf16.msra.mxu0 0
      %404 = vmatprep.subr.bf16.mxu0 0
      %405 = vmatpush1.bf16.msra.mxu0 0
      %406 = vmatprep.subr.bf16.mxu0 0
      %407 = vmatpush1.bf16.msra.mxu0 0
      %408 = vmatprep.subr.bf16.mxu0 0
      %409 = vmatpush1.bf16.msra.mxu0 0
      %410 = vmatprep.subr.bf16.mxu0 0
      %411 = vmatpush1.bf16.msra.mxu0 0
      %412 = vmatprep.subr.bf16.mxu0 %v400
      %413 = vmatpush1.bf16.msra.mxu0 %v397
      %414 = vmatprep.subr.bf16.mxu0 %v339
      %415 = vmatpush1.bf16.msra.mxu0 %v338
      %416 = vmatprep.subr.bf16.mxu0 %v337
      %417 = vmatpush1.bf16.msra.mxu0 %v336
      %418 = vmatprep.subr.bf16.mxu0 0
      %419 = vmatpush2.bf16.msra.mxu0 0
      %420 = vmatprep.subr.bf16.mxu0 0
      %421 = vmatpush2.bf16.msra.mxu0 0
      %422 = vmatprep.subr.bf16.mxu0 0
      %423 = vmatpush2.bf16.msra.mxu0 0
      %424 = vmatprep.subr.bf16.mxu0 0
      %425 = vmatpush2.bf16.msra.mxu0 0
      %426 = vmatprep.subr.bf16.mxu0 0
      %427 = vmatpush2.bf16.msra.mxu0 0
      %428 = vmatprep.subr.bf16.mxu0 0
      %429 = vmatpush2.bf16.msra.mxu0 0
      %430 = vmatprep.subr.bf16.mxu0 0
      %431 = vmatpush2.bf16.msra.mxu0 0
      %432 = vmatprep.subr.bf16.mxu0 0
      %433 = vmatpush2.bf16.msra.mxu0 0
      %434 = vmatprep.mubr.bf16.mxu0 0
      %435 = vmatmul.mubr.bf16.gmra.mxu0 %v348
      %v436 = vpop.f32.mrf.mxu0
      %v437 = vadd.f32 0.0, %v436
      %v438 = vpop.f32.mrf.mxu0
      %v439 = vadd.f32 0.0, %v438
      %v440 = vpop.f32.mrf.mxu0
      %v441 = vadd.f32 0.0, %v440
      %v442 = vpop.f32.mrf.mxu0
      %v443 = vadd.f32 0.0, %v442
      %444 = vmatprep.mubr.bf16.mxu0 0
      %445 = vmatmul.mubr.bf16.gmra.mxu0 %v351
      %v446 = vpop.f32.mrf.mxu0
      %v447 = vadd.f32 0.0, %v446
      %v448 = vpop.f32.mrf.mxu0
      %v449 = vadd.f32 0.0, %v448
      %v450 = vpop.f32.mrf.mxu0
      %v451 = vadd.f32 0.0, %v450
      %v452 = vpop.f32.mrf.mxu0
      %v453 = vadd.f32 0.0, %v452
      %454 = vmatprep.mubr.bf16.mxu0 0
      %455 = vmatmul.mubr.bf16.gmra.mxu0 %v354
      %v456 = vpop.f32.mrf.mxu0
      %v457 = vadd.f32 0.0, %v456
      %v458 = vpop.f32.mrf.mxu0
      %v459 = vadd.f32 0.0, %v458
      %v460 = vpop.f32.mrf.mxu0
      %v461 = vadd.f32 0.0, %v460
      %v462 = vpop.f32.mrf.mxu0
      %v463 = vadd.f32 0.0, %v462
      %464 = vmatprep.mubr.bf16.mxu0 0
      %465 = vmatmul.mubr.bf16.gmra.mxu0 %v357
      %v466 = vpop.f32.mrf.mxu0
      %v467 = vadd.f32 0.0, %v466
      %v468 = vpop.f32.mrf.mxu0
      %v469 = vadd.f32 0.0, %v468
      %v470 = vpop.f32.mrf.mxu0
      %v471 = vadd.f32 0.0, %v470
      %v472 = vpop.f32.mrf.mxu0
      %v473 = vadd.f32 0.0, %v472
      %474 = vmatprep.mubr.bf16.mxu0 0
      %475 = vmatmul.mubr.bf16.gmra.mxu0 %v360
      %v476 = vpop.f32.mrf.mxu0
      %v477 = vadd.f32 0.0, %v476
      %v478 = vpop.f32.mrf.mxu0
      %v479 = vadd.f32 0.0, %v478
      %v480 = vpop.f32.mrf.mxu0
      %v481 = vadd.f32 0.0, %v480
      %v482 = vpop.f32.mrf.mxu0
      %v483 = vadd.f32 0.0, %v482
      %484 = vmatprep.mubr.bf16.mxu0 0
      %485 = vmatmul.mubr.bf16.gmra.mxu0 %v363
      %v486 = vpop.f32.mrf.mxu0
      %v487 = vadd.f32 0.0, %v486
      %v488 = vpop.f32.mrf.mxu0
      %v489 = vadd.f32 0.0, %v488
      %v490 = vpop.f32.mrf.mxu0
      %v491 = vadd.f32 0.0, %v490
      %v492 = vpop.f32.mrf.mxu0
      %v493 = vadd.f32 0.0, %v492
      %494 = vmatprep.mubr.bf16.mxu0 0
      %495 = vmatmul.mubr.bf16.gmra.mxu0 %v366
      %v496 = vpop.f32.mrf.mxu0
      %v497 = vadd.f32 0.0, %v496
      %v498 = vpop.f32.mrf.mxu0
      %v499 = vadd.f32 0.0, %v498
      %v500 = vpop.f32.mrf.mxu0
      %v501 = vadd.f32 0.0, %v500
      %v502 = vpop.f32.mrf.mxu0
      %v503 = vadd.f32 0.0, %v502
      %504 = vmatprep.mubr.bf16.mxu0 0
      %505 = vmatmul.mubr.bf16.gmra.mxu0 %v369
      %v506 = vpop.f32.mrf.mxu0
      %v507 = vadd.f32 0.0, %v506
      %v508 = vpop.f32.mrf.mxu0
      %v509 = vadd.f32 0.0, %v508
      %v510 = vpop.f32.mrf.mxu0
      %v511 = vadd.f32 0.0, %v510
      %v512 = vpop.f32.mrf.mxu0
      %v513 = vadd.f32 0.0, %v512
      %514 = vmatprep.mubr.bf16.mxu0 0
      %515 = vmatmul.mubr.bf16.gmra.mxu0 %v372
      %v516 = vpop.f32.mrf.mxu0
      %v517 = vadd.f32 0.0, %v516
      %v518 = vpop.f32.mrf.mxu0
      %v519 = vadd.f32 0.0, %v518
      %v520 = vpop.f32.mrf.mxu0
      %v521 = vadd.f32 0.0, %v520
      %v522 = vpop.f32.mrf.mxu0
      %v523 = vadd.f32 0.0, %v522
      %524 = vmatprep.mubr.bf16.mxu0 0
      %525 = vmatmul.mubr.bf16.gmra.mxu0 %v375
      %v526 = vpop.f32.mrf.mxu0
      %v527 = vadd.f32 0.0, %v526
      %v528 = vpop.f32.mrf.mxu0
      %v529 = vadd.f32 0.0, %v528
      %v530 = vpop.f32.mrf.mxu0
      %v531 = vadd.f32 0.0, %v530
      %v532 = vpop.f32.mrf.mxu0
      %v533 = vadd.f32 0.0, %v532
      %534 = vmatprep.mubr.bf16.mxu0 0
      %535 = vmatmul.mubr.bf16.gmra.mxu0 %v378
      %v536 = vpop.f32.mrf.mxu0
      %v537 = vadd.f32 0.0, %v536
      %v538 = vpop.f32.mrf.mxu0
      %v539 = vadd.f32 0.0, %v538
      %v540 = vpop.f32.mrf.mxu0
      %v541 = vadd.f32 0.0, %v540
      %v542 = vpop.f32.mrf.mxu0
      %v543 = vadd.f32 0.0, %v542
      %544 = vmatprep.mubr.bf16.mxu0 0
      %545 = vmatmul.mubr.bf16.gmra.mxu0 %v381
      %v546 = vpop.f32.mrf.mxu0
      %v547 = vadd.f32 0.0, %v546
      %v548 = vpop.f32.mrf.mxu0
      %v549 = vadd.f32 0.0, %v548
      %v550 = vpop.f32.mrf.mxu0
      %v551 = vadd.f32 0.0, %v550
      %v552 = vpop.f32.mrf.mxu0
      %v553 = vadd.f32 0.0, %v552
      %554 = vmatprep.mubr.bf16.mxu0 0
      %555 = vmatmul.mubr.bf16.gmra.mxu0 %v384
      %v556 = vpop.f32.mrf.mxu0
      %v557 = vadd.f32 0.0, %v556
      %v558 = vpop.f32.mrf.mxu0
      %v559 = vadd.f32 0.0, %v558
      %v560 = vpop.f32.mrf.mxu0
      %v561 = vadd.f32 0.0, %v560
      %v562 = vpop.f32.mrf.mxu0
      %v563 = vadd.f32 0.0, %v562
      %564 = vmatprep.mubr.bf16.mxu0 0
      %565 = vmatmul.mubr.bf16.gmra.mxu0 %v387
      %v566 = vpop.f32.mrf.mxu0
      %v567 = vadd.f32 0.0, %v566
      %v568 = vpop.f32.mrf.mxu0
      %v569 = vadd.f32 0.0, %v568
      %v570 = vpop.f32.mrf.mxu0
      %v571 = vadd.f32 0.0, %v570
      %v572 = vpop.f32.mrf.mxu0
      %v573 = vadd.f32 0.0, %v572
      %574 = vmatprep.mubr.bf16.mxu0 0
      %575 = vmatmul.mubr.bf16.gmra.mxu0 %v390
      %v576 = vpop.f32.mrf.mxu0
      %v577 = vadd.f32 0.0, %v576
      %v578 = vpop.f32.mrf.mxu0
      %v579 = vadd.f32 0.0, %v578
      %v580 = vpop.f32.mrf.mxu0
      %v581 = vadd.f32 0.0, %v580
      %v582 = vpop.f32.mrf.mxu0
      %v583 = vadd.f32 0.0, %v582
      %584 = vmatprep.mubr.bf16.mxu0 0
      %585 = vmatmul.mubr.bf16.gmra.mxu0 %v393
      %v586 = vpop.f32.mrf.mxu0
      %v587 = vadd.f32 0.0, %v586
      %v588 = vpop.f32.mrf.mxu0
      %v589 = vadd.f32 0.0, %v588
      %v590 = vpop.f32.mrf.mxu0
      %v591 = vadd.f32 0.0, %v590
      %v592 = vpop.f32.mrf.mxu0
      %v593 = vadd.f32 0.0, %v592
      %594 = vdwg.mxu0
      %v595 = vld [vmem:[%s2] sm:$0x3]
      %v597 = vlaneseq
      %v598 = vshrl.u32 %v597, 7
      %v599 = vsub.s32 0, %v598
      %v600 = vrot.slane %v595, %v599
      %v601 = vlaneseq
      %v602 = vshrl.u32 %v601, 7
      %v603 = vsub.s32 1, %v602
      %v604 = vrot.slane %v595, %v603
      %v607 = vmul.f32 %v437, %v600
      %v608 = vmul.f32 %v439, %v604
      %v609 = vmul.f32 %v441, %v600
      %v610 = vmul.f32 %v443, %v604
      %v611 = vmul.f32 %v447, %v600
      %v612 = vmul.f32 %v449, %v604
      %v613 = vmul.f32 %v451, %v600
      %v614 = vmul.f32 %v453, %v604
      %v615 = vmul.f32 %v457, %v600
      %v616 = vmul.f32 %v459, %v604
      %v617 = vmul.f32 %v461, %v600
      %v618 = vmul.f32 %v463, %v604
      %v619 = vmul.f32 %v467, %v600
      %v620 = vmul.f32 %v469, %v604
      %v621 = vmul.f32 %v471, %v600
      %v622 = vmul.f32 %v473, %v604
      %v623 = vmul.f32 %v477, %v600
      %v624 = vmul.f32 %v479, %v604
      %v625 = vmul.f32 %v481, %v600
      %v626 = vmul.f32 %v483, %v604
      %v627 = vmul.f32 %v487, %v600
      %v628 = vmul.f32 %v489, %v604
      %v629 = vmul.f32 %v491, %v600
      %v630 = vmul.f32 %v493, %v604
      %v631 = vmul.f32 %v497, %v600
      %v632 = vmul.f32 %v499, %v604
      %v633 = vmul.f32 %v501, %v600
      %v634 = vmul.f32 %v503, %v604
      %v635 = vmul.f32 %v507, %v600
      %v636 = vmul.f32 %v509, %v604
      %v637 = vmul.f32 %v511, %v600
      %v638 = vmul.f32 %v513, %v604
      %v639 = vmul.f32 %v517, %v600
      %v640 = vmul.f32 %v519, %v604
      %v641 = vmul.f32 %v521, %v600
      %v642 = vmul.f32 %v523, %v604
      %v643 = vmul.f32 %v527, %v600
      %v644 = vmul.f32 %v529, %v604
      %v645 = vmul.f32 %v531, %v600
      %v646 = vmul.f32 %v533, %v604
      %v647 = vmul.f32 %v537, %v600
      %v648 = vmul.f32 %v539, %v604
      %v649 = vmul.f32 %v541, %v600
      %v650 = vmul.f32 %v543, %v604
      %v651 = vmul.f32 %v547, %v600
      %v652 = vmul.f32 %v549, %v604
      %v653 = vmul.f32 %v551, %v600
      %v654 = vmul.f32 %v553, %v604
      %v655 = vmul.f32 %v557, %v600
      %v656 = vmul.f32 %v559, %v604
      %v657 = vmul.f32 %v561, %v600
      %v658 = vmul.f32 %v563, %v604
      %v659 = vmul.f32 %v567, %v600
      %v660 = vmul.f32 %v569, %v604
      %v661 = vmul.f32 %v571, %v600
      %v662 = vmul.f32 %v573, %v604
      %v663 = vmul.f32 %v577, %v600
      %v664 = vmul.f32 %v579, %v604
      %v665 = vmul.f32 %v581, %v600
      %v666 = vmul.f32 %v583, %v604
      %v667 = vmul.f32 %v587, %v600
      %v668 = vmul.f32 %v589, %v604
      %v669 = vmul.f32 %v591, %v600
      %v670 = vmul.f32 %v593, %v604
      %v671 = vld [vmem:[%s3] sm:$0x3]
      %v673 = vlaneseq
      %v674 = vshrl.u32 %v673, 7
      %v675 = vsub.s32 0, %v674
      %v676 = vrot.slane %v671, %v675
      %v677 = vlaneseq
      %v678 = vshrl.u32 %v677, 7
      %v679 = vsub.s32 1, %v678
      %v680 = vrot.slane %v671, %v679
      %v683 = vadd.f32 %v607, %v676
      %v684 = vadd.f32 %v608, %v680
      %v685 = vadd.f32 %v609, %v676
      %v686 = vadd.f32 %v610, %v680
      %v687 = vadd.f32 %v611, %v676
      %v688 = vadd.f32 %v612, %v680
      %v689 = vadd.f32 %v613, %v676
      %v690 = vadd.f32 %v614, %v680
      %v691 = vadd.f32 %v615, %v676
      %v692 = vadd.f32 %v616, %v680
      %v693 = vadd.f32 %v617, %v676
      %v694 = vadd.f32 %v618, %v680
      %v695 = vadd.f32 %v619, %v676
      %v696 = vadd.f32 %v620, %v680
      %v697 = vadd.f32 %v621, %v676
      %v698 = vadd.f32 %v622, %v680
      %v699 = vadd.f32 %v623, %v676
      %v700 = vadd.f32 %v624, %v680
      %v701 = vadd.f32 %v625, %v676
      %v702 = vadd.f32 %v626, %v680
      %v703 = vadd.f32 %v627, %v676
      %v704 = vadd.f32 %v628, %v680
      %v705 = vadd.f32 %v629, %v676
      %v706 = vadd.f32 %v630, %v680
      %v707 = vadd.f32 %v631, %v676
      %v708 = vadd.f32 %v632, %v680
      %v709 = vadd.f32 %v633, %v676
      %v710 = vadd.f32 %v634, %v680
      %v711 = vadd.f32 %v635, %v676
      %v712 = vadd.f32 %v636, %v680
      %v713 = vadd.f32 %v637, %v676
      %v714 = vadd.f32 %v638, %v680
      %v715 = vadd.f32 %v639, %v676
      %v716 = vadd.f32 %v640, %v680
      %v717 = vadd.f32 %v641, %v676
      %v718 = vadd.f32 %v642, %v680
      %v719 = vadd.f32 %v643, %v676
      %v720 = vadd.f32 %v644, %v680
      %v721 = vadd.f32 %v645, %v676
      %v722 = vadd.f32 %v646, %v680
      %v723 = vadd.f32 %v647, %v676
      %v724 = vadd.f32 %v648, %v680
      %v725 = vadd.f32 %v649, %v676
      %v726 = vadd.f32 %v650, %v680
      %v727 = vadd.f32 %v651, %v676
      %v728 = vadd.f32 %v652, %v680
      %v729 = vadd.f32 %v653, %v676
      %v730 = vadd.f32 %v654, %v680
      %v731 = vadd.f32 %v655, %v676
      %v732 = vadd.f32 %v656, %v680
      %v733 = vadd.f32 %v657, %v676
      %v734 = vadd.f32 %v658, %v680
      %v735 = vadd.f32 %v659, %v676
      %v736 = vadd.f32 %v660, %v680
      %v737 = vadd.f32 %v661, %v676
      %v738 = vadd.f32 %v662, %v680
      %v739 = vadd.f32 %v663, %v676
      %v740 = vadd.f32 %v664, %v680
      %v741 = vadd.f32 %v665, %v676
      %v742 = vadd.f32 %v666, %v680
      %v743 = vadd.f32 %v667, %v676
      %v744 = vadd.f32 %v668, %v680
      %v745 = vadd.f32 %v669, %v676
      %v746 = vadd.f32 %v670, %v680
      %v747 = vxor.u32 %v683, 2147483648
      %v748 = vxor.u32 %v684, 2147483648
      %v749 = vxor.u32 %v685, 2147483648
      %v750 = vxor.u32 %v686, 2147483648
      %v751 = vxor.u32 %v687, 2147483648
      %v752 = vxor.u32 %v688, 2147483648
      %v753 = vxor.u32 %v689, 2147483648
      %v754 = vxor.u32 %v690, 2147483648
      %v755 = vxor.u32 %v691, 2147483648
      %v756 = vxor.u32 %v692, 2147483648
      %v757 = vxor.u32 %v693, 2147483648
      %v758 = vxor.u32 %v694, 2147483648
      %v759 = vxor.u32 %v695, 2147483648
      %v760 = vxor.u32 %v696, 2147483648
      %v761 = vxor.u32 %v697, 2147483648
      %v762 = vxor.u32 %v698, 2147483648
      %v763 = vxor.u32 %v699, 2147483648
      %v764 = vxor.u32 %v700, 2147483648
      %v765 = vxor.u32 %v701, 2147483648
      %v766 = vxor.u32 %v702, 2147483648
      %v767 = vxor.u32 %v703, 2147483648
      %v768 = vxor.u32 %v704, 2147483648
      %v769 = vxor.u32 %v705, 2147483648
      %v770 = vxor.u32 %v706, 2147483648
      %v771 = vxor.u32 %v707, 2147483648
      %v772 = vxor.u32 %v708, 2147483648
      %v773 = vxor.u32 %v709, 2147483648
      %v774 = vxor.u32 %v710, 2147483648
      %v775 = vxor.u32 %v711, 2147483648
      %v776 = vxor.u32 %v712, 2147483648
      %v777 = vxor.u32 %v713, 2147483648
      %v778 = vxor.u32 %v714, 2147483648
      %v779 = vxor.u32 %v715, 2147483648
      %v780 = vxor.u32 %v716, 2147483648
      %v781 = vxor.u32 %v717, 2147483648
      %v782 = vxor.u32 %v718, 2147483648
      %v783 = vxor.u32 %v719, 2147483648
      %v784 = vxor.u32 %v720, 2147483648
      %v785 = vxor.u32 %v721, 2147483648
      %v786 = vxor.u32 %v722, 2147483648
      %v787 = vxor.u32 %v723, 2147483648
      %v788 = vxor.u32 %v724, 2147483648
      %v789 = vxor.u32 %v725, 2147483648
      %v790 = vxor.u32 %v726, 2147483648
      %v791 = vxor.u32 %v727, 2147483648
      %v792 = vxor.u32 %v728, 2147483648
      %v793 = vxor.u32 %v729, 2147483648
      %v794 = vxor.u32 %v730, 2147483648
      %v795 = vxor.u32 %v731, 2147483648
      %v796 = vxor.u32 %v732, 2147483648
      %v797 = vxor.u32 %v733, 2147483648
      %v798 = vxor.u32 %v734, 2147483648
      %v799 = vxor.u32 %v735, 2147483648
      %v800 = vxor.u32 %v736, 2147483648
      %v801 = vxor.u32 %v737, 2147483648
      %v802 = vxor.u32 %v738, 2147483648
      %v803 = vxor.u32 %v739, 2147483648
      %v804 = vxor.u32 %v740, 2147483648
      %v805 = vxor.u32 %v741, 2147483648
      %v806 = vxor.u32 %v742, 2147483648
      %v807 = vxor.u32 %v743, 2147483648
      %v808 = vxor.u32 %v744, 2147483648
      %v809 = vxor.u32 %v745, 2147483648
      %v810 = vxor.u32 %v746, 2147483648
      %v811 = vmul.f32 %v747, 1.442695
      %v812 = vpow.pop %v811
      %v813 = vmul.f32 %v748, 1.442695
      %v814 = vpow.pop %v813
      %v815 = vmul.f32 %v749, 1.442695
      %v816 = vpow.pop %v815
      %v817 = vmul.f32 %v750, 1.442695
      %v818 = vpow.pop %v817
      %v819 = vmul.f32 %v751, 1.442695
      %v820 = vpow.pop %v819
      %v821 = vmul.f32 %v752, 1.442695
      %v822 = vpow.pop %v821
      %v823 = vmul.f32 %v753, 1.442695
      %v824 = vpow.pop %v823
      %v825 = vmul.f32 %v754, 1.442695
      %v826 = vpow.pop %v825
      %v827 = vmul.f32 %v755, 1.442695
      %v828 = vpow.pop %v827
      %v829 = vmul.f32 %v756, 1.442695
      %v830 = vpow.pop %v829
      %v831 = vmul.f32 %v757, 1.442695
      %v832 = vpow.pop %v831
      %v833 = vmul.f32 %v758, 1.442695
      %v834 = vpow.pop %v833
      %v835 = vmul.f32 %v759, 1.442695
      %v836 = vpow.pop %v835
      %v837 = vmul.f32 %v760, 1.442695
      %v838 = vpow.pop %v837
      %v839 = vmul.f32 %v761, 1.442695
      %v840 = vpow.pop %v839
      %v841 = vmul.f32 %v762, 1.442695
      %v842 = vpow.pop %v841
      %v843 = vmul.f32 %v763, 1.442695
      %v844 = vpow.pop %v843
      %v845 = vmul.f32 %v764, 1.442695
      %v846 = vpow.pop %v845
      %v847 = vmul.f32 %v765, 1.442695
      %v848 = vpow.pop %v847
      %v849 = vmul.f32 %v766, 1.442695
      %v850 = vpow.pop %v849
      %v851 = vmul.f32 %v767, 1.442695
      %v852 = vpow.pop %v851
      %v853 = vmul.f32 %v768, 1.442695
      %v854 = vpow.pop %v853
      %v855 = vmul.f32 %v769, 1.442695
      %v856 = vpow.pop %v855
      %v857 = vmul.f32 %v770, 1.442695
      %v858 = vpow.pop %v857
      %v859 = vmul.f32 %v771, 1.442695
      %v860 = vpow.pop %v859
      %v861 = vmul.f32 %v772, 1.442695
      %v862 = vpow.pop %v861
      %v863 = vmul.f32 %v773, 1.442695
      %v864 = vpow.pop %v863
      %v865 = vmul.f32 %v774, 1.442695
      %v866 = vpow.pop %v865
      %v867 = vmul.f32 %v775, 1.442695
      %v868 = vpow.pop %v867
      %v869 = vmul.f32 %v776, 1.442695
      %v870 = vpow.pop %v869
      %v871 = vmul.f32 %v777, 1.442695
      %v872 = vpow.pop %v871
      %v873 = vmul.f32 %v778, 1.442695
      %v874 = vpow.pop %v873
      %v875 = vmul.f32 %v779, 1.442695
      %v876 = vpow.pop %v875
      %v877 = vmul.f32 %v780, 1.442695
      %v878 = vpow.pop %v877
      %v879 = vmul.f32 %v781, 1.442695
      %v880 = vpow.pop %v879
      %v881 = vmul.f32 %v782, 1.442695
      %v882 = vpow.pop %v881
      %v883 = vmul.f32 %v783, 1.442695
      %v884 = vpow.pop %v883
      %v885 = vmul.f32 %v784, 1.442695
      %v886 = vpow.pop %v885
      %v887 = vmul.f32 %v785, 1.442695
      %v888 = vpow.pop %v887
      %v889 = vmul.f32 %v786, 1.442695
      %v890 = vpow.pop %v889
      %v891 = vmul.f32 %v787, 1.442695
      %v892 = vpow.pop %v891
      %v893 = vmul.f32 %v788, 1.442695
      %v894 = vpow.pop %v893
      %v895 = vmul.f32 %v789, 1.442695
      %v896 = vpow.pop %v895
      %v897 = vmul.f32 %v790, 1.442695
      %v898 = vpow.pop %v897
      %v899 = vmul.f32 %v791, 1.442695
      %v900 = vpow.pop %v899
      %v901 = vmul.f32 %v792, 1.442695
      %v902 = vpow.pop %v901
      %v903 = vmul.f32 %v793, 1.442695
      %v904 = vpow.pop %v903
      %v905 = vmul.f32 %v794, 1.442695
      %v906 = vpow.pop %v905
      %v907 = vmul.f32 %v795, 1.442695
      %v908 = vpow.pop %v907
      %v909 = vmul.f32 %v796, 1.442695
      %v910 = vpow.pop %v909
      %v911 = vmul.f32 %v797, 1.442695
      %v912 = vpow.pop %v911
      %v913 = vmul.f32 %v798, 1.442695
      %v914 = vpow.pop %v913
      %v915 = vmul.f32 %v799, 1.442695
      %v916 = vpow.pop %v915
      %v917 = vmul.f32 %v800, 1.442695
      %v918 = vpow.pop %v917
      %v919 = vmul.f32 %v801, 1.442695
      %v920 = vpow.pop %v919
      %v921 = vmul.f32 %v802, 1.442695
      %v922 = vpow.pop %v921
      %v923 = vmul.f32 %v803, 1.442695
      %v924 = vpow.pop %v923
      %v925 = vmul.f32 %v804, 1.442695
      %v926 = vpow.pop %v925
      %v927 = vmul.f32 %v805, 1.442695
      %v928 = vpow.pop %v927
      %v929 = vmul.f32 %v806, 1.442695
      %v930 = vpow.pop %v929
      %v931 = vmul.f32 %v807, 1.442695
      %v932 = vpow.pop %v931
      %v933 = vmul.f32 %v808, 1.442695
      %v934 = vpow.pop %v933
      %v935 = vmul.f32 %v809, 1.442695
      %v936 = vpow.pop %v935
      %v937 = vmul.f32 %v810, 1.442695
      %v938 = vpow.pop %v937
      %v939 = vadd.f32 %v812, 1.0
      %v940 = vadd.f32 %v814, 1.0
      %v941 = vadd.f32 %v816, 1.0
      %v942 = vadd.f32 %v818, 1.0
      %v943 = vadd.f32 %v820, 1.0
      %v944 = vadd.f32 %v822, 1.0
      %v945 = vadd.f32 %v824, 1.0
      %v946 = vadd.f32 %v826, 1.0
      %v947 = vadd.f32 %v828, 1.0
      %v948 = vadd.f32 %v830, 1.0
      %v949 = vadd.f32 %v832, 1.0
      %v950 = vadd.f32 %v834, 1.0
      %v951 = vadd.f32 %v836, 1.0
      %v952 = vadd.f32 %v838, 1.0
      %v953 = vadd.f32 %v840, 1.0
      %v954 = vadd.f32 %v842, 1.0
      %v955 = vadd.f32 %v844, 1.0
      %v956 = vadd.f32 %v846, 1.0
      %v957 = vadd.f32 %v848, 1.0
      %v958 = vadd.f32 %v850, 1.0
      %v959 = vadd.f32 %v852, 1.0
      %v960 = vadd.f32 %v854, 1.0
      %v961 = vadd.f32 %v856, 1.0
      %v962 = vadd.f32 %v858, 1.0
      %v963 = vadd.f32 %v860, 1.0
      %v964 = vadd.f32 %v862, 1.0
      %v965 = vadd.f32 %v864, 1.0
      %v966 = vadd.f32 %v866, 1.0
      %v967 = vadd.f32 %v868, 1.0
      %v968 = vadd.f32 %v870, 1.0
      %v969 = vadd.f32 %v872, 1.0
      %v970 = vadd.f32 %v874, 1.0
      %v971 = vadd.f32 %v876, 1.0
      %v972 = vadd.f32 %v878, 1.0
      %v973 = vadd.f32 %v880, 1.0
      %v974 = vadd.f32 %v882, 1.0
      %v975 = vadd.f32 %v884, 1.0
      %v976 = vadd.f32 %v886, 1.0
      %v977 = vadd.f32 %v888, 1.0
      %v978 = vadd.f32 %v890, 1.0
      %v979 = vadd.f32 %v892, 1.0
      %v980 = vadd.f32 %v894, 1.0
      %v981 = vadd.f32 %v896, 1.0
      %v982 = vadd.f32 %v898, 1.0
      %v983 = vadd.f32 %v900, 1.0
      %v984 = vadd.f32 %v902, 1.0
      %v985 = vadd.f32 %v904, 1.0
      %v986 = vadd.f32 %v906, 1.0
      %v987 = vadd.f32 %v908, 1.0
      %v988 = vadd.f32 %v910, 1.0
      %v989 = vadd.f32 %v912, 1.0
      %v990 = vadd.f32 %v914, 1.0
      %v991 = vadd.f32 %v916, 1.0
      %v992 = vadd.f32 %v918, 1.0
      %v993 = vadd.f32 %v920, 1.0
      %v994 = vadd.f32 %v922, 1.0
      %v995 = vadd.f32 %v924, 1.0
      %v996 = vadd.f32 %v926, 1.0
      %v997 = vadd.f32 %v928, 1.0
      %v998 = vadd.f32 %v930, 1.0
      %v999 = vadd.f32 %v932, 1.0
      %v1000 = vadd.f32 %v934, 1.0
      %v1001 = vadd.f32 %v936, 1.0
      %v1002 = vadd.f32 %v938, 1.0
      %v1003 = vrcp.pop %v939
      %v1004 = vmul.f32 1.0, %v1003
      %v1005 = vrcp.pop %v940
      %v1006 = vmul.f32 1.0, %v1005
      %v1007 = vrcp.pop %v941
      %v1008 = vmul.f32 1.0, %v1007
      %v1009 = vrcp.pop %v942
      %v1010 = vmul.f32 1.0, %v1009
      %v1011 = vrcp.pop %v943
      %v1012 = vmul.f32 1.0, %v1011
      %v1013 = vrcp.pop %v944
      %v1014 = vmul.f32 1.0, %v1013
      %v1015 = vrcp.pop %v945
      %v1016 = vmul.f32 1.0, %v1015
      %v1017 = vrcp.pop %v946
      %v1018 = vmul.f32 1.0, %v1017
      %v1019 = vrcp.pop %v947
      %v1020 = vmul.f32 1.0, %v1019
      %v1021 = vrcp.pop %v948
      %v1022 = vmul.f32 1.0, %v1021
      %v1023 = vrcp.pop %v949
      %v1024 = vmul.f32 1.0, %v1023
      %v1025 = vrcp.pop %v950
      %v1026 = vmul.f32 1.0, %v1025
      %v1027 = vrcp.pop %v951
      %v1028 = vmul.f32 1.0, %v1027
      %v1029 = vrcp.pop %v952
      %v1030 = vmul.f32 1.0, %v1029
      %v1031 = vrcp.pop %v953
      %v1032 = vmul.f32 1.0, %v1031
      %v1033 = vrcp.pop %v954
      %v1034 = vmul.f32 1.0, %v1033
      %v1035 = vrcp.pop %v955
      %v1036 = vmul.f32 1.0, %v1035
      %v1037 = vrcp.pop %v956
      %v1038 = vmul.f32 1.0, %v1037
      %v1039 = vrcp.pop %v957
      %v1040 = vmul.f32 1.0, %v1039
      %v1041 = vrcp.pop %v958
      %v1042 = vmul.f32 1.0, %v1041
      %v1043 = vrcp.pop %v959
      %v1044 = vmul.f32 1.0, %v1043
      %v1045 = vrcp.pop %v960
      %v1046 = vmul.f32 1.0, %v1045
      %v1047 = vrcp.pop %v961
      %v1048 = vmul.f32 1.0, %v1047
      %v1049 = vrcp.pop %v962
      %v1050 = vmul.f32 1.0, %v1049
      %v1051 = vrcp.pop %v963
      %v1052 = vmul.f32 1.0, %v1051
      %v1053 = vrcp.pop %v964
      %v1054 = vmul.f32 1.0, %v1053
      %v1055 = vrcp.pop %v965
      %v1056 = vmul.f32 1.0, %v1055
      %v1057 = vrcp.pop %v966
      %v1058 = vmul.f32 1.0, %v1057
      %v1059 = vrcp.pop %v967
      %v1060 = vmul.f32 1.0, %v1059
      %v1061 = vrcp.pop %v968
      %v1062 = vmul.f32 1.0, %v1061
      %v1063 = vrcp.pop %v969
      %v1064 = vmul.f32 1.0, %v1063
      %v1065 = vrcp.pop %v970
      %v1066 = vmul.f32 1.0, %v1065
      %v1067 = vrcp.pop %v971
      %v1068 = vmul.f32 1.0, %v1067
      %v1069 = vrcp.pop %v972
      %v1070 = vmul.f32 1.0, %v1069
      %v1071 = vrcp.pop %v973
      %v1072 = vmul.f32 1.0, %v1071
      %v1073 = vrcp.pop %v974
      %v1074 = vmul.f32 1.0, %v1073
      %v1075 = vrcp.pop %v975
      %v1076 = vmul.f32 1.0, %v1075
      %v1077 = vrcp.pop %v976
      %v1078 = vmul.f32 1.0, %v1077
      %v1079 = vrcp.pop %v977
      %v1080 = vmul.f32 1.0, %v1079
      %v1081 = vrcp.pop %v978
      %v1082 = vmul.f32 1.0, %v1081
      %v1083 = vrcp.pop %v979
      %v1084 = vmul.f32 1.0, %v1083
      %v1085 = vrcp.pop %v980
      %v1086 = vmul.f32 1.0, %v1085
      %v1087 = vrcp.pop %v981
      %v1088 = vmul.f32 1.0, %v1087
      %v1089 = vrcp.pop %v982
      %v1090 = vmul.f32 1.0, %v1089
      %v1091 = vrcp.pop %v983
      %v1092 = vmul.f32 1.0, %v1091
      %v1093 = vrcp.pop %v984
      %v1094 = vmul.f32 1.0, %v1093
      %v1095 = vrcp.pop %v985
      %v1096 = vmul.f32 1.0, %v1095
      %v1097 = vrcp.pop %v986
      %v1098 = vmul.f32 1.0, %v1097
      %v1099 = vrcp.pop %v987
      %v1100 = vmul.f32 1.0, %v1099
      %v1101 = vrcp.pop %v988
      %v1102 = vmul.f32 1.0, %v1101
      %v1103 = vrcp.pop %v989
      %v1104 = vmul.f32 1.0, %v1103
      %v1105 = vrcp.pop %v990
      %v1106 = vmul.f32 1.0, %v1105
      %v1107 = vrcp.pop %v991
      %v1108 = vmul.f32 1.0, %v1107
      %v1109 = vrcp.pop %v992
      %v1110 = vmul.f32 1.0, %v1109
      %v1111 = vrcp.pop %v993
      %v1112 = vmul.f32 1.0, %v1111
      %v1113 = vrcp.pop %v994
      %v1114 = vmul.f32 1.0, %v1113
      %v1115 = vrcp.pop %v995
      %v1116 = vmul.f32 1.0, %v1115
      %v1117 = vrcp.pop %v996
      %v1118 = vmul.f32 1.0, %v1117
      %v1119 = vrcp.pop %v997
      %v1120 = vmul.f32 1.0, %v1119
      %v1121 = vrcp.pop %v998
      %v1122 = vmul.f32 1.0, %v1121
      %v1123 = vrcp.pop %v999
      %v1124 = vmul.f32 1.0, %v1123
      %v1125 = vrcp.pop %v1000
      %v1126 = vmul.f32 1.0, %v1125
      %v1127 = vrcp.pop %v1001
      %v1128 = vmul.f32 1.0, %v1127
      %v1129 = vrcp.pop %v1002
      %v1130 = vmul.f32 1.0, %v1129
      %v1131 = vmul.f32 %v683, %v1004
      %v1132 = vmul.f32 %v684, %v1006
      %v1133 = vmul.f32 %v685, %v1008
      %v1134 = vmul.f32 %v686, %v1010
      %v1135 = vmul.f32 %v687, %v1012
      %v1136 = vmul.f32 %v688, %v1014
      %v1137 = vmul.f32 %v689, %v1016
      %v1138 = vmul.f32 %v690, %v1018
      %v1139 = vmul.f32 %v691, %v1020
      %v1140 = vmul.f32 %v692, %v1022
      %v1141 = vmul.f32 %v693, %v1024
      %v1142 = vmul.f32 %v694, %v1026
      %v1143 = vmul.f32 %v695, %v1028
      %v1144 = vmul.f32 %v696, %v1030
      %v1145 = vmul.f32 %v697, %v1032
      %v1146 = vmul.f32 %v698, %v1034
      %v1147 = vmul.f32 %v699, %v1036
      %v1148 = vmul.f32 %v700, %v1038
      %v1149 = vmul.f32 %v701, %v1040
      %v1150 = vmul.f32 %v702, %v1042
      %v1151 = vmul.f32 %v703, %v1044
      %v1152 = vmul.f32 %v704, %v1046
      %v1153 = vmul.f32 %v705, %v1048
      %v1154 = vmul.f32 %v706, %v1050
      %v1155 = vmul.f32 %v707, %v1052
      %v1156 = vmul.f32 %v708, %v1054
      %v1157 = vmul.f32 %v709, %v1056
      %v1158 = vmul.f32 %v710, %v1058
      %v1159 = vmul.f32 %v711, %v1060
      %v1160 = vmul.f32 %v712, %v1062
      %v1161 = vmul.f32 %v713, %v1064
      %v1162 = vmul.f32 %v714, %v1066
      %v1163 = vmul.f32 %v715, %v1068
      %v1164 = vmul.f32 %v716, %v1070
      %v1165 = vmul.f32 %v717, %v1072
      %v1166 = vmul.f32 %v718, %v1074
      %v1167 = vmul.f32 %v719, %v1076
      %v1168 = vmul.f32 %v720, %v1078
      %v1169 = vmul.f32 %v721, %v1080
      %v1170 = vmul.f32 %v722, %v1082
      %v1171 = vmul.f32 %v723, %v1084
      %v1172 = vmul.f32 %v724, %v1086
      %v1173 = vmul.f32 %v725, %v1088
      %v1174 = vmul.f32 %v726, %v1090
      %v1175 = vmul.f32 %v727, %v1092
      %v1176 = vmul.f32 %v728, %v1094
      %v1177 = vmul.f32 %v729, %v1096
      %v1178 = vmul.f32 %v730, %v1098
      %v1179 = vmul.f32 %v731, %v1100
      %v1180 = vmul.f32 %v732, %v1102
      %v1181 = vmul.f32 %v733, %v1104
      %v1182 = vmul.f32 %v734, %v1106
      %v1183 = vmul.f32 %v735, %v1108
      %v1184 = vmul.f32 %v736, %v1110
      %v1185 = vmul.f32 %v737, %v1112
      %v1186 = vmul.f32 %v738, %v1114
      %v1187 = vmul.f32 %v739, %v1116
      %v1188 = vmul.f32 %v740, %v1118
      %v1189 = vmul.f32 %v741, %v1120
      %v1190 = vmul.f32 %v742, %v1122
      %v1191 = vmul.f32 %v743, %v1124
      %v1192 = vmul.f32 %v744, %v1126
      %v1193 = vmul.f32 %v745, %v1128
      %v1194 = vmul.f32 %v746, %v1130
      %v1195 = vpack.c.bf16 %v1133, %v1131
      %v1196 = vpack.c.bf16 %v1134, %v1132
      %v1197 = vpack.c.bf16 %v1137, %v1135
      %v1198 = vpack.c.bf16 %v1138, %v1136
      %v1199 = vpack.c.bf16 %v1141, %v1139
      %v1200 = vpack.c.bf16 %v1142, %v1140
      %v1201 = vpack.c.bf16 %v1145, %v1143
      %v1202 = vpack.c.bf16 %v1146, %v1144
      %v1203 = vpack.c.bf16 %v1149, %v1147
      %v1204 = vpack.c.bf16 %v1150, %v1148
      %v1205 = vpack.c.bf16 %v1153, %v1151
      %v1206 = vpack.c.bf16 %v1154, %v1152
      %v1207 = vpack.c.bf16 %v1157, %v1155
      %v1208 = vpack.c.bf16 %v1158, %v1156
      %v1209 = vpack.c.bf16 %v1161, %v1159
      %v1210 = vpack.c.bf16 %v1162, %v1160
      %v1211 = vpack.c.bf16 %v1165, %v1163
      %v1212 = vpack.c.bf16 %v1166, %v1164
      %v1213 = vpack.c.bf16 %v1169, %v1167
      %v1214 = vpack.c.bf16 %v1170, %v1168
      %v1215 = vpack.c.bf16 %v1173, %v1171
      %v1216 = vpack.c.bf16 %v1174, %v1172
      %v1217 = vpack.c.bf16 %v1177, %v1175
      %v1218 = vpack.c.bf16 %v1178, %v1176
      %v1219 = vpack.c.bf16 %v1181, %v1179
      %v1220 = vpack.c.bf16 %v1182, %v1180
      %v1221 = vpack.c.bf16 %v1185, %v1183
      %v1222 = vpack.c.bf16 %v1186, %v1184
      %v1223 = vpack.c.bf16 %v1189, %v1187
      %v1224 = vpack.c.bf16 %v1190, %v1188
      %v1225 = vpack.c.bf16 %v1193, %v1191
      %v1226 = vpack.c.bf16 %v1194, %v1192
      %v1259 = vunpack.c.l.b16 %v1195
      %v1260 = vunpack.c.l.b16 %v1196
      %v1261 = vunpack.c.h.b16 %v1195
      %v1262 = vunpack.c.h.b16 %v1196
      %v1263 = vunpack.c.l.b16 %v1197
      %v1264 = vunpack.c.l.b16 %v1198
      %v1265 = vunpack.c.h.b16 %v1197
      %v1266 = vunpack.c.h.b16 %v1198
      %v1267 = vunpack.c.l.b16 %v1199
      %v1268 = vunpack.c.l.b16 %v1200
      %v1269 = vunpack.c.h.b16 %v1199
      %v1270 = vunpack.c.h.b16 %v1200
      %v1271 = vunpack.c.l.b16 %v1201
      %v1272 = vunpack.c.l.b16 %v1202
      %v1273 = vunpack.c.h.b16 %v1201
      %v1274 = vunpack.c.h.b16 %v1202
      %v1275 = vunpack.c.l.b16 %v1203
      %v1276 = vunpack.c.l.b16 %v1204
      %v1277 = vunpack.c.h.b16 %v1203
      %v1278 = vunpack.c.h.b16 %v1204
      %v1279 = vunpack.c.l.b16 %v1205
      %v1280 = vunpack.c.l.b16 %v1206
      %v1281 = vunpack.c.h.b16 %v1205
      %v1282 = vunpack.c.h.b16 %v1206
      %v1283 = vunpack.c.l.b16 %v1207
      %v1284 = vunpack.c.l.b16 %v1208
      %v1285 = vunpack.c.h.b16 %v1207
      %v1286 = vunpack.c.h.b16 %v1208
      %v1287 = vunpack.c.l.b16 %v1209
      %v1288 = vunpack.c.l.b16 %v1210
      %v1289 = vunpack.c.h.b16 %v1209
      %v1290 = vunpack.c.h.b16 %v1210
      %v1291 = vunpack.c.l.b16 %v1211
      %v1292 = vunpack.c.l.b16 %v1212
      %v1293 = vunpack.c.h.b16 %v1211
      %v1294 = vunpack.c.h.b16 %v1212
      %v1295 = vunpack.c.l.b16 %v1213
      %v1296 = vunpack.c.l.b16 %v1214
      %v1297 = vunpack.c.h.b16 %v1213
      %v1298 = vunpack.c.h.b16 %v1214
      %v1299 = vunpack.c.l.b16 %v1215
      %v1300 = vunpack.c.l.b16 %v1216
      %v1301 = vunpack.c.h.b16 %v1215
      %v1302 = vunpack.c.h.b16 %v1216
      %v1303 = vunpack.c.l.b16 %v1217
      %v1304 = vunpack.c.l.b16 %v1218
      %v1305 = vunpack.c.h.b16 %v1217
      %v1306 = vunpack.c.h.b16 %v1218
      %v1307 = vunpack.c.l.b16 %v1219
      %v1308 = vunpack.c.l.b16 %v1220
      %v1309 = vunpack.c.h.b16 %v1219
      %v1310 = vunpack.c.h.b16 %v1220
      %v1311 = vunpack.c.l.b16 %v1221
      %v1312 = vunpack.c.l.b16 %v1222
      %v1313 = vunpack.c.h.b16 %v1221
      %v1314 = vunpack.c.h.b16 %v1222
      %v1315 = vunpack.c.l.b16 %v1223
      %v1316 = vunpack.c.l.b16 %v1224
      %v1317 = vunpack.c.h.b16 %v1223
      %v1318 = vunpack.c.h.b16 %v1224
      %v1319 = vunpack.c.l.b16 %v1225
      %v1320 = vunpack.c.l.b16 %v1226
      %v1321 = vunpack.c.h.b16 %v1225
      %v1322 = vunpack.c.h.b16 %v1226
      %v1323 = vpack.c.b16 %v1260, %v1259
      %v1324 = vpack.c.b16 %v1262, %v1261
      %v1325 = vpack.c.b16 %v1264, %v1263
      %v1326 = vpack.c.b16 %v1266, %v1265
      %v1327 = vpack.c.b16 %v1268, %v1267
      %v1328 = vpack.c.b16 %v1270, %v1269
      %v1329 = vpack.c.b16 %v1272, %v1271
      %v1330 = vpack.c.b16 %v1274, %v1273
      %v1331 = vpack.c.b16 %v1276, %v1275
      %v1332 = vpack.c.b16 %v1278, %v1277
      %v1333 = vpack.c.b16 %v1280, %v1279
      %v1334 = vpack.c.b16 %v1282, %v1281
      %v1335 = vpack.c.b16 %v1284, %v1283
      %v1336 = vpack.c.b16 %v1286, %v1285
      %v1337 = vpack.c.b16 %v1288, %v1287
      %v1338 = vpack.c.b16 %v1290, %v1289
      %v1339 = vpack.c.b16 %v1292, %v1291
      %v1340 = vpack.c.b16 %v1294, %v1293
      %v1341 = vpack.c.b16 %v1296, %v1295
      %v1342 = vpack.c.b16 %v1298, %v1297
      %v1343 = vpack.c.b16 %v1300, %v1299
      %v1344 = vpack.c.b16 %v1302, %v1301
      %v1345 = vpack.c.b16 %v1304, %v1303
      %v1346 = vpack.c.b16 %v1306, %v1305
      %v1347 = vpack.c.b16 %v1308, %v1307
      %v1348 = vpack.c.b16 %v1310, %v1309
      %v1349 = vpack.c.b16 %v1312, %v1311
      %v1350 = vpack.c.b16 %v1314, %v1313
      %v1351 = vpack.c.b16 %v1316, %v1315
      %v1352 = vpack.c.b16 %v1318, %v1317
      %v1353 = vpack.c.b16 %v1320, %v1319
      %v1354 = vpack.c.b16 %v1322, %v1321
      %1387 = vst [vmem:[%s201] sm:$0xff] %v1323
      %1388 = vst [vmem:[%s201 + $0x8] sm:$0xff] %v1324
      %1389 = vst [vmem:[%s201 + $0x10] sm:$0xff] %v1325
      %1390 = vst [vmem:[%s201 + $0x18] sm:$0xff] %v1326
      %1391 = vst [vmem:[%s201 + $0x20] sm:$0xff] %v1327
      %1392 = vst [vmem:[%s201 + $0x28] sm:$0xff] %v1328
      %1393 = vst [vmem:[%s201 + $0x30] sm:$0xff] %v1329
      %1394 = vst [vmem:[%s201 + $0x38] sm:$0xff] %v1330
      %1395 = vst [vmem:[%s201 + $0x40] sm:$0xff] %v1331
      %1396 = vst [vmem:[%s201 + $0x48] sm:$0xff] %v1332
      %1397 = vst [vmem:[%s201 + $0x50] sm:$0xff] %v1333
      %1398 = vst [vmem:[%s201 + $0x58] sm:$0xff] %v1334
      %1399 = vst [vmem:[%s201 + $0x60] sm:$0xff] %v1335
      %1400 = vst [vmem:[%s201 + $0x68] sm:$0xff] %v1336
      %1401 = vst [vmem:[%s201 + $0x70] sm:$0xff] %v1337
      %1402 = vst [vmem:[%s201 + $0x78] sm:$0xff] %v1338
      %1403 = vst [vmem:[%s201 + $0x80] sm:$0xff] %v1339
      %1404 = vst [vmem:[%s201 + $0x88] sm:$0xff] %v1340
      %1405 = vst [vmem:[%s201 + $0x90] sm:$0xff] %v1341
      %1406 = vst [vmem:[%s201 + $0x98] sm:$0xff] %v1342
      %1407 = vst [vmem:[%s201 + $0xa0] sm:$0xff] %v1343
      %1408 = vst [vmem:[%s201 + $0xa8] sm:$0xff] %v1344
      %1409 = vst [vmem:[%s201 + $0xb0] sm:$0xff] %v1345
      %1410 = vst [vmem:[%s201 + $0xb8] sm:$0xff] %v1346
      %1411 = vst [vmem:[%s201 + $0xc0] sm:$0xff] %v1347
      %1412 = vst [vmem:[%s201 + $0xc8] sm:$0xff] %v1348
      %1413 = vst [vmem:[%s201 + $0xd0] sm:$0xff] %v1349
      %1414 = vst [vmem:[%s201 + $0xd8] sm:$0xff] %v1350
      %1415 = vst [vmem:[%s201 + $0xe0] sm:$0xff] %v1351
      %1416 = vst [vmem:[%s201 + $0xe8] sm:$0xff] %v1352
      %1417 = vst [vmem:[%s201 + $0xf0] sm:$0xff] %v1353
      %1418 = vst [vmem:[%s201 + $0xf8] sm:$0xff] %v1354
      %s1419 = smul.u32 32, %s15
      %p1420 = scmp.lt.s32.totalorder %s1419, 63
      %s1421 = scalar_select %p1420, %s1419, 63
      %s1422 = smul.addr %s1421, 2
      %s1423 = smul.addr %s1422, 4
      %s1424 = scalar_lea.vmem %s4, %s1423
      // Predicated region
      $region37: #{conv_module_forward.1} parent=35 // pred_check
        %p1425 = pneg %p122
      $region38: #{conv_module_forward.1} parent=35 // pred_check_branch
        %1427 = sbr.rel (%p1425) target = $region40
      $region39: #{conv_module_forward.1} parent=35 // pred_region
        %s1428 = smul.u32 32, %s15
      $region40: #{conv_module_forward.1} parent=35 // pred_fallthru
        _
    $region36: #{conv_module_forward.1} parent=5 // pred_fallthru
      _
    %p1429 = scmp.le.s32.totalorder 2, %s10
    // Predicated region
    $region41: #{conv_module_forward.1} parent=5 // pred_check
      %p1430 = pneg %p1429
    $region42: #{conv_module_forward.1} parent=5 // pred_check_branch
      %1432 = sbr.rel (%p1430) target = $region44
    $region43: #{conv_module_forward.1} parent=5 // pred_region
      %s1433 = ssub.s32 %s10, 2
      // Predicated region
      $region45: #{conv_module_forward.1} parent=43 // pred_check
        %p1434 = pneg %p128
      $region46: #{conv_module_forward.1} parent=43 // pred_check_branch
        %1436 = sbr.rel (%p1434) target = $region48
      $region47: #{conv_module_forward.1} parent=43 // pred_region
        %s1437 = smul.u32 32, %s16
        %p1438 = scmp.lt.s32.totalorder %s1437, 63
        %s1439 = scalar_select %p1438, %s1437, 63
        %s1440 = smul.addr %s1439, 2
        %s1441 = smul.addr %s1440, 4
        %s1442 = scalar_lea.vmem %s4, %s1441
      $region48: #{conv_module_forward.1} parent=43 // pred_fallthru
        _
    $region44: #{conv_module_forward.1} parent=5 // pred_fallthru
      _
  $region6: #{conv_module_forward.1} parent=0 // loop_footer
    %s14 = sadd.s32 1, %s10
  $region7: #{conv_module_forward.1} parent=0 // loop_footer_branch
    %9 = sbr.rel target = $region3
  $region8: #{conv_module_forward.1} parent=0 // loop_exit
    _

</llo_original>
